<compile_context>
chip_gen: v7x
topology: tpu7x:2x2x1
jax: 0.10.0
libtpu: 0.0.40
codegen_flags: <defaults>
</compile_context>

<pallas_src>
import math
from functools import partial

import jax
import jax.numpy as jnp
from jax.experimental import pallas as pl
from jax.experimental.pallas import tpu as pltpu


def _round_up(x, m):
    return -(-x // m) * m


def timestep_embedder_kernel(t_ref, w1c_ref, w1s_ref, b1_ref, w2_ref, b2_ref,
                             out_ref, *, max_period):
    # t_ref:   (TB, 1)      f32 timesteps for this batch tile
    # w1c_ref: (F/2, H)     first Linear weight, cos half, (in, out) layout
    # w1s_ref: (F/2, H)     first Linear weight, sin half, (in, out) layout
    # b1_ref:  (1, H)
    # w2_ref:  (H, Hp)      second Linear weight, (in, out), out-dim padded to 128
    # b2_ref:  (1, Hp)
    # out_ref: (TB, Hp)
    half = w1c_ref.shape[0]

    # ---- sinusoidal frequency embedding (cos / sin halves kept separate) ----
    k = jax.lax.broadcasted_iota(jnp.int32, (1, half), 1).astype(jnp.float32)
    freqs = jnp.exp((-math.log(max_period) / half) * k)          # (1, half)
    args = t_ref[...] * freqs                                    # (TB, half)

    # ---- Linear(F -> H) + SiLU.
    # concat([cos, sin]) @ W1^T is computed as two K=F/2 matmuls against the
    # pre-split, pre-transposed weight halves: no lane-axis concat, no in-kernel
    # weight transpose, MXU work identical. bf16 operands, f32 accumulation.
    cos_a = jnp.cos(args).astype(w1c_ref.dtype)
    sin_a = jnp.sin(args).astype(w1s_ref.dtype)
    h = (jnp.dot(cos_a, w1c_ref[...], preferred_element_type=jnp.float32)
         + jnp.dot(sin_a, w1s_ref[...], preferred_element_type=jnp.float32)
         + b1_ref[...])
    h = h * jax.nn.sigmoid(h)                                    # SiLU (f32)

    # ---- Linear(H -> H); Hp padded to 128 lanes -> unmasked output stores ----
    out = jnp.dot(h.astype(w2_ref.dtype), w2_ref[...],
                  preferred_element_type=jnp.float32) + b2_ref[...]
    out_ref[...] = out.astype(out_ref.dtype)


def prepare_timestep_embedder_params(w1, b1, w2, b2, *, param_dtype=jnp.bfloat16):
    """One-time weight preparation (call at module init, NOT per forward).

    Inputs in PyTorch Linear (out, in) layout: w1 (H, F), b1 (H,), w2 (H, H),
    b2 (H,). Returns kernel-ready arrays: W1 transposed to (in, out) and split
    into cos/sin halves, W2 transposed with its out-dim padded to 128 lanes.
    """
    H, F = w1.shape
    assert F % 2 == 0, "odd frequency_embedding_size not supported"
    # TODO(synk): for odd F PyTorch appends one zero embedding column; it
    # multiplies a zero activation so it could simply be dropped if needed.
    assert w2.shape == (H, H)
    half = F // 2
    Hp = _round_up(H, 128)

    w1t = jnp.asarray(w1, jnp.float32).T                          # (F, H)
    w1c = w1t[:half].astype(param_dtype)                          # (F/2, H)
    w1s = w1t[half:].astype(param_dtype)                          # (F/2, H)
    b1r = jnp.asarray(b1, jnp.float32).reshape(1, H)
    w2t = (jnp.zeros((H, Hp), jnp.float32)
           .at[:, :H].set(jnp.asarray(w2, jnp.float32).T)
           .astype(param_dtype))                                  # (H, Hp)
    b2p = jnp.zeros((1, Hp), jnp.float32).at[0, :H].set(
        jnp.asarray(b2, jnp.float32))                             # (1, Hp)
    return w1c, w1s, b1r, w2t, b2p


def timestep_embedder(t, params, *, max_period=10000.0, block_b=None,
                      out_dtype=jnp.float32):
    """t: (B,) timesteps; params from prepare_timestep_embedder_params.
    Returns (B, H) timestep embeddings (f32 by default)."""
    w1c, w1s, b1r, w2t, b2p = params
    half, H = w1c.shape
    F = 2 * half
    Hp = w2t.shape[1]

    t = jnp.asarray(t, jnp.float32)
    (B,) = t.shape

    # Batch tile: multiple of 8 sublanes, aim for >= 2 grid steps so the
    # "parallel" axis can shard across v7x's two TensorCores, cap at 512 rows
    # to amortize the ~0.35 us per-grid-step overhead for large B.
    if block_b is None:
        block_b = min(512, _round_up(max(-(-B // 2), 1), 8))
    block_b = min(block_b, _round_up(B, 8))
    B_pad = _round_up(B, block_b)

    t2 = jnp.zeros((B_pad, 1), jnp.float32).at[:B, 0].set(t)

    # Explicit VMEM budget (v5e default scoped limit is only 16 MiB).
    w_item = jnp.dtype(w2t.dtype).itemsize
    o_item = jnp.dtype(out_dtype).itemsize
    vmem_bytes = (2 * block_b * 4                       # t, double-buffered
                  + 2 * block_b * Hp * o_item           # out, double-buffered
                  + (F * H + H * Hp) * w_item           # resident weights
                  + (H + Hp) * 4)                       # biases
    vmem_limit = int(min(64 << 20, max(16 << 20, 2 * vmem_bytes + (2 << 20))))

    def _build(weight_mode):
        def w_spec(shape):
            return pl.BlockSpec(shape, lambda i: (0, 0), pipeline_mode=weight_mode)
        return pl.pallas_call(
            partial(timestep_embedder_kernel, max_period=float(max_period)),
            out_shape=jax.ShapeDtypeStruct((B_pad, Hp), out_dtype),
            grid=(B_pad // block_b,),
            in_specs=[
                pl.BlockSpec((block_b, 1), lambda i: (i, 0)),  # t (tiled over B)
                w_spec((half, H)),                             # W1 cos half
                w_spec((half, H)),                             # W1 sin half
                w_spec((1, H)),                                # b1
                w_spec((H, Hp)),                               # W2 (padded out dim)
                w_spec((1, Hp)),                               # b2
            ],
            out_specs=pl.BlockSpec((block_b, Hp), lambda i: (i, 0)),
            compiler_params=pltpu.CompilerParams(
                dimension_semantics=("parallel",),
                vmem_limit_bytes=vmem_limit),
        )

    try:
        # Constant-index-map weights never change across the grid: single-buffer.
        out = _build(pl.Buffered(1))(t2, w1c, w1s, b1r, w2t, b2p)
    except Exception:
        # Fallback: default pipelining if Buffered(1) is rejected by this jax.
        out = _build(None)(t2, w1c, w1s, b1r, w2t, b2p)

    return out[:B, :H]


def timestep_embedder_ref(t, w1, b1, w2, b2, max_period=10000.0):
    """Pure-JAX f32 reference (mirrors the PyTorch module)."""
    t = jnp.asarray(t, jnp.float32)
    F = w1.shape[1]
    half = F // 2
    freqs = jnp.exp(-math.log(max_period) *
                    jnp.arange(half, dtype=jnp.float32) / half)
    args = t[:, None] * freqs[None, :]
    emb = jnp.concatenate([jnp.cos(args), jnp.sin(args)], axis=-1)
    h = jnp.dot(emb, w1.T, precision=jax.lax.Precision.HIGHEST) + b1
    h = h * jax.nn.sigmoid(h)
    return jnp.dot(h, w2.T, precision=jax.lax.Precision.HIGHEST) + b2


if __name__ == "__main__":
    # Small shapes consistent with TimestepEmbedder(hidden_size=32,
    # frequency_embedding_size=256).
    B = 2
    F = 256          # frequency_embedding_size (module default)
    H = 32           # hidden_size (small test shape)

    key = jax.random.PRNGKey(0)
    kt, k1, k2, k3, k4 = jax.random.split(key, 5)

    t = jax.random.uniform(kt, (B,), jnp.float32, 0.0, 1000.0)
    # PyTorch Linear layout: weight (out, in), bias (out,)
    w1 = 0.02 * jax.random.normal(k1, (H, F), jnp.float32)
    b1 = 0.01 * jax.random.normal(k2, (H,), jnp.float32)
    w2 = 0.02 * jax.random.normal(k3, (H, H), jnp.float32)
    b2 = 0.01 * jax.random.normal(k4, (H,), jnp.float32)

    params = prepare_timestep_embedder_params(w1, b1, w2, b2)   # one-time prep
    out = timestep_embedder(t, params)
    out = jax.block_until_ready(out)

    ref = timestep_embedder_ref(t, w1, b1, w2, b2)
    assert out.shape == (B, H)
    # bf16 matmul operands with f32 accumulation vs f32 HIGHEST reference.
    assert jnp.allclose(out, ref, atol=2e-3, rtol=2e-3), \
        float(jnp.max(jnp.abs(out - ref)))

    print("KERNEL_OK")
</pallas_src>

<mosaic_0001>
module attributes {stable_mosaic.version = 11 : i64} {
  func.func @timestep_embedder_kernel(%arg0: i32, %arg1: memref<8x1xf32, #tpu.memory_space<vmem>>, %arg2: memref<128x32xbf16, #tpu.memory_space<vmem>>, %arg3: memref<128x32xbf16, #tpu.memory_space<vmem>>, %arg4: memref<1x32xf32, #tpu.memory_space<vmem>>, %arg5: memref<32x128xbf16, #tpu.memory_space<vmem>>, %arg6: memref<1x128xf32, #tpu.memory_space<vmem>>, %arg7: memref<8x128xf32, #tpu.memory_space<vmem>>) attributes {dimension_semantics = [#tpu.dimension_semantics<parallel>], iteration_bounds = array<i64: 1>, scalar_prefetch = 0 : i64, scratch_operands = 0 : i64, tpu.core_type = #tpu.core_type<tc>, window_params = [{transform_indices = @transform_0, window_bounds = array<i64: 8, 1>}, {pipeline_mode = #tpu.pipeline_mode<synchronous>, transform_indices = @transform_1, window_bounds = array<i64: 128, 32>}, {pipeline_mode = #tpu.pipeline_mode<synchronous>, transform_indices = @transform_2, window_bounds = array<i64: 128, 32>}, {pipeline_mode = #tpu.pipeline_mode<synchronous>, transform_indices = @transform_3, window_bounds = array<i64: 1, 32>}, {pipeline_mode = #tpu.pipeline_mode<synchronous>, transform_indices = @transform_4, window_bounds = array<i64: 32, 128>}, {pipeline_mode = #tpu.pipeline_mode<synchronous>, transform_indices = @transform_5, window_bounds = array<i64: 1, 128>}, {transform_indices = @transform_6, window_bounds = array<i64: 8, 128>}]} {
    %0 = tpu.iota {dimensions = array<i32: 1>} : vector<1x128xi32>
    %1 = arith.sitofp %0 : vector<1x128xi32> to vector<1x128xf32>
    %cst = arith.constant -0.0719557852 : f32
    %2 = vector.broadcast %cst : f32 to vector<1x128xf32>
    %3 = arith.mulf %2, %1 : vector<1x128xf32>
    %4 = math.exp %3 : vector<1x128xf32>
    %c0 = arith.constant 0 : index
    %c0_0 = arith.constant 0 : index
    %5 = vector.load %arg1[%c0, %c0_0] : memref<8x1xf32, #tpu.memory_space<vmem>>, vector<8x1xf32>
    %6 = vector.broadcast %5 : vector<8x1xf32> to vector<8x128xf32>
    %7 = vector.broadcast %4 : vector<1x128xf32> to vector<8x128xf32>
    %8 = arith.mulf %6, %7 : vector<8x128xf32>
    %9 = math.cos %8 : vector<8x128xf32>
    %10 = arith.truncf %9 : vector<8x128xf32> to vector<8x128xbf16>
    %11 = math.sin %8 : vector<8x128xf32>
    %12 = arith.truncf %11 : vector<8x128xf32> to vector<8x128xbf16>
    %c0_1 = arith.constant 0 : index
    %c0_2 = arith.constant 0 : index
    %13 = vector.load %arg2[%c0_1, %c0_2] : memref<128x32xbf16, #tpu.memory_space<vmem>>, vector<128x32xbf16>
    %cst_3 = arith.constant dense<0.000000e+00> : vector<8x32xf32>
    %14 = tpu.matmul %10, %13, %cst_3 {dimension_numbers = #tpu.dot_dimension_numbers<[1], [0], [0], [1], [0, 0, 1, 1], [], []>} : vector<8x128xbf16>, vector<128x32xbf16>, vector<8x32xf32> -> vector<8x32xf32>
    %c0_4 = arith.constant 0 : index
    %c0_5 = arith.constant 0 : index
    %15 = vector.load %arg3[%c0_4, %c0_5] : memref<128x32xbf16, #tpu.memory_space<vmem>>, vector<128x32xbf16>
    %cst_6 = arith.constant dense<0.000000e+00> : vector<8x32xf32>
    %16 = tpu.matmul %12, %15, %cst_6 {dimension_numbers = #tpu.dot_dimension_numbers<[1], [0], [0], [1], [0, 0, 1, 1], [], []>} : vector<8x128xbf16>, vector<128x32xbf16>, vector<8x32xf32> -> vector<8x32xf32>
    %17 = arith.addf %14, %16 : vector<8x32xf32>
    %c0_7 = arith.constant 0 : index
    %c0_8 = arith.constant 0 : index
    %18 = vector.load %arg4[%c0_7, %c0_8] : memref<1x32xf32, #tpu.memory_space<vmem>>, vector<1x32xf32>
    %19 = vector.broadcast %18 : vector<1x32xf32> to vector<8x32xf32>
    %20 = arith.addf %17, %19 : vector<8x32xf32>
    %21 = arith.negf %20 : vector<8x32xf32>
    %22 = math.exp %21 : vector<8x32xf32>
    %cst_9 = arith.constant 1.000000e+00 : f32
    %23 = vector.broadcast %cst_9 : f32 to vector<8x32xf32>
    %24 = arith.addf %23, %22 : vector<8x32xf32>
    %25 = arith.divf %23, %24 : vector<8x32xf32>
    %26 = arith.mulf %20, %25 : vector<8x32xf32>
    %27 = arith.truncf %26 : vector<8x32xf32> to vector<8x32xbf16>
    %c0_10 = arith.constant 0 : index
    %c0_11 = arith.constant 0 : index
    %28 = vector.load %arg5[%c0_10, %c0_11] : memref<32x128xbf16, #tpu.memory_space<vmem>>, vector<32x128xbf16>
    %cst_12 = arith.constant dense<0.000000e+00> : vector<8x128xf32>
    %29 = tpu.matmul %27, %28, %cst_12 {dimension_numbers = #tpu.dot_dimension_numbers<[1], [0], [0], [1], [0, 0, 1, 1], [], []>} : vector<8x32xbf16>, vector<32x128xbf16>, vector<8x128xf32> -> vector<8x128xf32>
    %c0_13 = arith.constant 0 : index
    %c0_14 = arith.constant 0 : index
    %30 = vector.load %arg6[%c0_13, %c0_14] : memref<1x128xf32, #tpu.memory_space<vmem>>, vector<1x128xf32>
    %31 = vector.broadcast %30 : vector<1x128xf32> to vector<8x128xf32>
    %32 = arith.addf %29, %31 : vector<8x128xf32>
    %c0_15 = arith.constant 0 : index
    %c0_16 = arith.constant 0 : index
    %33 = vector.load %arg7[%c0_15, %c0_16] : memref<8x128xf32, #tpu.memory_space<vmem>>, vector<8x128xf32>
    tpu.vector_store %arg7[%c0_15, %c0_16], %32 {strides = array<i32>} : memref<8x128xf32, #tpu.memory_space<vmem>>, vector<8x128xf32>,
    return
  }
  func.func @transform_0(%arg0: i32) -> (i32, i32) {
    %c0_i32 = arith.constant 0 : i32
    %c0_i32_0 = arith.constant 0 : i32
    return %arg0, %c0_i32 : i32, i32
  }
  func.func @transform_1(%arg0: i32) -> (i32, i32) {
    %c0_i32 = arith.constant 0 : i32
    %c0_i32_0 = arith.constant 0 : i32
    %c0_i32_1 = arith.constant 0 : i32
    return %c0_i32, %c0_i32_0 : i32, i32
  }
  func.func @transform_2(%arg0: i32) -> (i32, i32) {
    %c0_i32 = arith.constant 0 : i32
    %c0_i32_0 = arith.constant 0 : i32
    %c0_i32_1 = arith.constant 0 : i32
    return %c0_i32, %c0_i32_0 : i32, i32
  }
  func.func @transform_3(%arg0: i32) -> (i32, i32) {
    %c0_i32 = arith.constant 0 : i32
    %c0_i32_0 = arith.constant 0 : i32
    %c0_i32_1 = arith.constant 0 : i32
    return %c0_i32, %c0_i32_0 : i32, i32
  }
  func.func @transform_4(%arg0: i32) -> (i32, i32) {
    %c0_i32 = arith.constant 0 : i32
    %c0_i32_0 = arith.constant 0 : i32
    %c0_i32_1 = arith.constant 0 : i32
    return %c0_i32, %c0_i32_0 : i32, i32
  }
  func.func @transform_5(%arg0: i32) -> (i32, i32) {
    %c0_i32 = arith.constant 0 : i32
    %c0_i32_0 = arith.constant 0 : i32
    %c0_i32_1 = arith.constant 0 : i32
    return %c0_i32, %c0_i32_0 : i32, i32
  }
  func.func @transform_6(%arg0: i32) -> (i32, i32) {
    %c0_i32 = arith.constant 0 : i32
    %c0_i32_0 = arith.constant 0 : i32
    return %arg0, %c0_i32 : i32, i32
  }
}

module attributes {stable_mosaic.version = 11 : i64} {
  func.func @timestep_embedder_kernel(%arg0: i32, %arg1: memref<8x1xf32, #tpu.memory_space<vmem>>, %arg2: memref<128x32xbf16, #tpu.memory_space<vmem>>, %arg3: memref<128x32xbf16, #tpu.memory_space<vmem>>, %arg4: memref<1x32xf32, #tpu.memory_space<vmem>>, %arg5: memref<32x128xbf16, #tpu.memory_space<vmem>>, %arg6: memref<1x128xf32, #tpu.memory_space<vmem>>, %arg7: memref<8x128xf32, #tpu.memory_space<vmem>>) attributes {dimension_semantics = [#tpu.dimension_semantics<parallel>], iteration_bounds = array<i64: 1>, scalar_prefetch = 0 : i64, scratch_operands = 0 : i64, tpu.core_type = #tpu.core_type<tc>, window_params = [{transform_indices = @transform_0, window_bounds = array<i64: 8, 1>}, {pipeline_mode = #tpu.pipeline_mode<synchronous>, transform_indices = @transform_1, window_bounds = array<i64: 128, 32>}, {pipeline_mode = #tpu.pipeline_mode<synchronous>, transform_indices = @transform_2, window_bounds = array<i64: 128, 32>}, {pipeline_mode = #tpu.pipeline_mode<synchronous>, transform_indices = @transform_3, window_bounds = array<i64: 1, 32>}, {pipeline_mode = #tpu.pipeline_mode<synchronous>, transform_indices = @transform_4, window_bounds = array<i64: 32, 128>}, {pipeline_mode = #tpu.pipeline_mode<synchronous>, transform_indices = @transform_5, window_bounds = array<i64: 1, 128>}, {transform_indices = @transform_6, window_bounds = array<i64: 8, 128>}]} {
    %0 = tpu.iota {dimensions = array<i32: 1>} : vector<1x128xi32>
    %1 = arith.sitofp %0 : vector<1x128xi32> to vector<1x128xf32>
    %cst = arith.constant -0.0719557852 : f32
    %2 = vector.broadcast %cst : f32 to vector<1x128xf32>
    %3 = arith.mulf %2, %1 : vector<1x128xf32>
    %4 = math.exp %3 : vector<1x128xf32>
    %c0 = arith.constant 0 : index
    %c0_0 = arith.constant 0 : index
    %5 = vector.load %arg1[%c0, %c0_0] : memref<8x1xf32, #tpu.memory_space<vmem>>, vector<8x1xf32>
    %6 = vector.broadcast %5 : vector<8x1xf32> to vector<8x128xf32>
    %7 = vector.broadcast %4 : vector<1x128xf32> to vector<8x128xf32>
    %8 = arith.mulf %6, %7 : vector<8x128xf32>
    %9 = math.cos %8 : vector<8x128xf32>
    %10 = arith.truncf %9 : vector<8x128xf32> to vector<8x128xbf16>
    %11 = math.sin %8 : vector<8x128xf32>
    %12 = arith.truncf %11 : vector<8x128xf32> to vector<8x128xbf16>
    %c0_1 = arith.constant 0 : index
    %c0_2 = arith.constant 0 : index
    %13 = vector.load %arg2[%c0_1, %c0_2] : memref<128x32xbf16, #tpu.memory_space<vmem>>, vector<128x32xbf16>
    %cst_3 = arith.constant dense<0.000000e+00> : vector<8x32xf32>
    %14 = tpu.matmul %10, %13, %cst_3 {dimension_numbers = #tpu.dot_dimension_numbers<[1], [0], [0], [1], [0, 0, 1, 1], [], []>} : vector<8x128xbf16>, vector<128x32xbf16>, vector<8x32xf32> -> vector<8x32xf32>
    %c0_4 = arith.constant 0 : index
    %c0_5 = arith.constant 0 : index
    %15 = vector.load %arg3[%c0_4, %c0_5] : memref<128x32xbf16, #tpu.memory_space<vmem>>, vector<128x32xbf16>
    %cst_6 = arith.constant dense<0.000000e+00> : vector<8x32xf32>
    %16 = tpu.matmul %12, %15, %cst_6 {dimension_numbers = #tpu.dot_dimension_numbers<[1], [0], [0], [1], [0, 0, 1, 1], [], []>} : vector<8x128xbf16>, vector<128x32xbf16>, vector<8x32xf32> -> vector<8x32xf32>
    %17 = arith.addf %14, %16 : vector<8x32xf32>
    %c0_7 = arith.constant 0 : index
    %c0_8 = arith.constant 0 : index
    %18 = vector.load %arg4[%c0_7, %c0_8] : memref<1x32xf32, #tpu.memory_space<vmem>>, vector<1x32xf32>
    %19 = vector.broadcast %18 : vector<1x32xf32> to vector<8x32xf32>
    %20 = arith.addf %17, %19 : vector<8x32xf32>
    %21 = arith.negf %20 : vector<8x32xf32>
    %22 = math.exp %21 : vector<8x32xf32>
    %cst_9 = arith.constant 1.000000e+00 : f32
    %23 = vector.broadcast %cst_9 : f32 to vector<8x32xf32>
    %24 = arith.addf %23, %22 : vector<8x32xf32>
    %25 = arith.divf %23, %24 : vector<8x32xf32>
    %26 = arith.mulf %20, %25 : vector<8x32xf32>
    %27 = arith.truncf %26 : vector<8x32xf32> to vector<8x32xbf16>
    %c0_10 = arith.constant 0 : index
    %c0_11 = arith.constant 0 : index
    %28 = vector.load %arg5[%c0_10, %c0_11] : memref<32x128xbf16, #tpu.memory_space<vmem>>, vector<32x128xbf16>
    %cst_12 = arith.constant dense<0.000000e+00> : vector<8x128xf32>
    %29 = tpu.matmul %27, %28, %cst_12 {dimension_numbers = #tpu.dot_dimension_numbers<[1], [0], [0], [1], [0, 0, 1, 1], [], []>} : vector<8x32xbf16>, vector<32x128xbf16>, vector<8x128xf32> -> vector<8x128xf32>
    %c0_13 = arith.constant 0 : index
    %c0_14 = arith.constant 0 : index
    %30 = vector.load %arg6[%c0_13, %c0_14] : memref<1x128xf32, #tpu.memory_space<vmem>>, vector<1x128xf32>
    %31 = vector.broadcast %30 : vector<1x128xf32> to vector<8x128xf32>
    %32 = arith.addf %29, %31 : vector<8x128xf32>
    %c0_15 = arith.constant 0 : index
    %c0_16 = arith.constant 0 : index
    %33 = vector.load %arg7[%c0_15, %c0_16] : memref<8x128xf32, #tpu.memory_space<vmem>>, vector<8x128xf32>
    tpu.vector_store %arg7[%c0_15, %c0_16], %32 {strides = array<i32>} : memref<8x128xf32, #tpu.memory_space<vmem>>, vector<8x128xf32>,
    return
  }
  func.func @transform_0(%arg0: i32) -> (i32, i32) {
    %c0_i32 = arith.constant 0 : i32
    %c0_i32_0 = arith.constant 0 : i32
    return %arg0, %c0_i32 : i32, i32
  }
  func.func @transform_1(%arg0: i32) -> (i32, i32) {
    %c0_i32 = arith.constant 0 : i32
    %c0_i32_0 = arith.constant 0 : i32
    %c0_i32_1 = arith.constant 0 : i32
    return %c0_i32, %c0_i32_0 : i32, i32
  }
  func.func @transform_2(%arg0: i32) -> (i32, i32) {
    %c0_i32 = arith.constant 0 : i32
    %c0_i32_0 = arith.constant 0 : i32
    %c0_i32_1 = arith.constant 0 : i32
    return %c0_i32, %c0_i32_0 : i32, i32
  }
  func.func @transform_3(%arg0: i32) -> (i32, i32) {
    %c0_i32 = arith.constant 0 : i32
    %c0_i32_0 = arith.constant 0 : i32
    %c0_i32_1 = arith.constant 0 : i32
    return %c0_i32, %c0_i32_0 : i32, i32
  }
  func.func @transform_4(%arg0: i32) -> (i32, i32) {
    %c0_i32 = arith.constant 0 : i32
    %c0_i32_0 = arith.constant 0 : i32
    %c0_i32_1 = arith.constant 0 : i32
    return %c0_i32, %c0_i32_0 : i32, i32
  }
  func.func @transform_5(%arg0: i32) -> (i32, i32) {
    %c0_i32 = arith.constant 0 : i32
    %c0_i32_0 = arith.constant 0 : i32
    %c0_i32_1 = arith.constant 0 : i32
    return %c0_i32, %c0_i32_0 : i32, i32
  }
  func.func @transform_6(%arg0: i32) -> (i32, i32) {
    %c0_i32 = arith.constant 0 : i32
    %c0_i32_0 = arith.constant 0 : i32
    return %arg0, %c0_i32 : i32, i32
  }
}

</mosaic_0001>

<llo_original>
// kernel: tpu_custom_call.1
$region0: #{tpu_custom_call.1}
  #allocation0 [shape = 'u32[]', space=smem, size = 0x4, offset = 0x4, fixed_abs, tag = 'smem constant byte address 0x4 - core index']
  #allocation1 [shape = 'u32[144,128]{1,0:T(1,128)}', space=vmem, size = 0x12000, scoped, tag = 'internal scratch']
  %s0 = inlined_call_operand.vmem [shape: f32[8,1], index: 0, kind: input, shape index: {}]
  %s1 = inlined_call_operand.vmem [shape: bf16[128,32], index: 1, kind: input, shape index: {}]
  %s2 = inlined_call_operand.vmem [shape: bf16[128,32], index: 2, kind: input, shape index: {}]
  %s3 = inlined_call_operand.vmem [shape: f32[1,32], index: 3, kind: input, shape index: {}]
  %s4 = inlined_call_operand.vmem [shape: bf16[32,128], index: 4, kind: input, shape index: {}]
  %s5 = inlined_call_operand.vmem [shape: f32[1,128], index: 5, kind: input, shape index: {}]
  %s6 = inlined_call_operand.hbm [shape: f32[8,128], index: 6, kind: output, shape index: {}]
  %s7 = sld [smem:[#allocation0]]
  $region34: #{tpu_custom_call.1} parent=0
    _
  %s9 = ssub.s32 1, %s7
  %s10 = scalar_select 0, %s9, %s7
  $region1: #{tpu_custom_call.1} parent=0
    #allocation2 [shape = 'u8[4096]{0}', space=vmem, size = 0x1000, scoped, tag = 'output window, operand 0, single buffered']
    #allocation3 [shape = 's32[1]{0}', space=sflag, size = 0x4, scoped, tag = 'scoped memory for tpu_custom_call.1']
    %11 = vsyncpa [#allocation3], 0
    // Predicated region
    $region2: #{tpu_custom_call.1} parent=1 // pred_check
      _
    $region3: #{tpu_custom_call.1} parent=1 // pred_check_branch
      %13 = sbr.rel (0) target = $region5
    $region4: #{tpu_custom_call.1} parent=1 // pred_region
      _
    $region5: #{tpu_custom_call.1} parent=1 // pred_fallthru
      _
    // Predicated region
    $region6: #{tpu_custom_call.1} parent=1 // pred_check
      _
    $region7: #{tpu_custom_call.1} parent=1 // pred_check_branch
      %15 = sbr.rel (0) target = $region9
    $region8: #{tpu_custom_call.1} parent=1 // pred_region
      _
    $region9: #{tpu_custom_call.1} parent=1 // pred_fallthru
      _
    // Predicated region
    $region10: #{tpu_custom_call.1} parent=1 // pred_check
      _
    $region11: #{tpu_custom_call.1} parent=1 // pred_check_branch
      %17 = sbr.rel (0) target = $region13
    $region12: #{tpu_custom_call.1} parent=1 // pred_region
      _
    $region13: #{tpu_custom_call.1} parent=1 // pred_fallthru
      _
    // Predicated region
    $region14: #{tpu_custom_call.1} parent=1 // pred_check
      _
    $region15: #{tpu_custom_call.1} parent=1 // pred_check_branch
      %19 = sbr.rel (0) target = $region17
    $region16: #{tpu_custom_call.1} parent=1 // pred_region
      _
    $region17: #{tpu_custom_call.1} parent=1 // pred_fallthru
      _
    // Predicated region
    $region18: #{tpu_custom_call.1} parent=1 // pred_check
      _
    $region19: #{tpu_custom_call.1} parent=1 // pred_check_branch
      %21 = sbr.rel (0) target = $region21
    $region20: #{tpu_custom_call.1} parent=1 // pred_region
      _
    $region21: #{tpu_custom_call.1} parent=1 // pred_fallthru
      _
    // Predicated region
    $region22: #{tpu_custom_call.1} parent=1 // pred_check
      _
    $region23: #{tpu_custom_call.1} parent=1 // pred_check_branch
      %23 = sbr.rel (0) target = $region25
    $region24: #{tpu_custom_call.1} parent=1 // pred_region
      _
    $region25: #{tpu_custom_call.1} parent=1 // pred_fallthru
      _
    %v25 = vlaneseq
    %v26 = vand.u32 %v25, 127
    %v27 = vcvt.s32.f32 %v26
    %v28 = vmul.f32 %v27, -0.071955785
    %v29 = vmul.f32 %v28, 1.442695
    %v30 = vpow.pop %v29
    %v31 = vld [vmem:[%s0] sm:$0xff]
    %33 = vset.pattern.permute.xlu0 0
    %34 = vperm.xlu0 %33, %v31
    %v35 = vpop.permute.xlu0 %34
    %v37 = vmul.f32 %v35, %v30
    %v38 = vand.u32 2147483647, %v37
    %vm39 = vcmp.le.f32.partialorder %v38, 0.7853982
    %vm40 = vcmp.lt.s32.totalorder %v37, 0
    %v41 = vand.u32 %v37, 2139095040
    %v42 = vshrl.u32 %v41, 23
    %v43 = vsub.s32 %v42, 127
    %v44 = vand.u32 2147483647, %v37
    %v45 = vand.u32 %v44, 8388607
    %v46 = vor.u32 %v45, 8388608
    %v47 = vsub.s32 0, %v46
    %v48 = vadd.s32 %v43, 1
    %vm49 = vcmp.gt.s32.totalorder %v48, 0
    %v50 = vsel %vm49, %v48, 0
    %v51 = vshrl.u32 %v50, 5
    %v52 = vand.u32 %v50, 31
    %v53 = vsub.s32 32, %v52
    %v54 = vshrl.u32 683565275, %v53
    %v55 = vshll.u32 683565275, %v52
    %v56 = vshrl.u32 2475754826, %v53
    %v57 = vor.u32 %v55, %v56
    %v58 = vshll.u32 2475754826, %v52
    %v59 = vshrl.u32 2131351028, %v53
    %v60 = vor.u32 %v58, %v59
    %v61 = vshll.u32 2131351028, %v52
    %v62 = vshrl.u32 2102212464, %v53
    %v63 = vor.u32 %v61, %v62
    %v64 = vshll.u32 2102212464, %v52
    %v65 = vshrl.u32 920167782, %v53
    %v66 = vor.u32 %v64, %v65
    %v67 = vshll.u32 920167782, %v52
    %v68 = vshrl.u32 1326507024, %v53
    %v69 = vor.u32 %v67, %v68
    %vm70 = vcmp.lt.s32.totalorder %v51, 1
    %vm71 = vcmp.lt.s32.totalorder %v51, 2
    %vm72 = vcmp.lt.s32.totalorder %v51, 3
    %vm73 = vcmp.lt.s32.totalorder %v51, 4
    %v74 = vsel %vm70, %v54, %v57
    %v75 = vsel %vm73, %v63, 2102212464
    %v76 = vsel %vm72, %v60, %v75
    %v77 = vsel %vm71, %v74, %v76
    %v78 = vsel %vm70, %v57, %v60
    %v79 = vsel %vm73, %v66, 920167782
    %v80 = vsel %vm72, %v63, %v79
    %v81 = vsel %vm71, %v78, %v80
    %v82 = vsel %vm70, %v60, %v63
    %v83 = vsel %vm73, %v69, 1326507024
    %v84 = vsel %vm72, %v66, %v83
    %v85 = vsel %vm71, %v82, %v84
    %v86 = vshll.u32 %v46, 8
    %v87 = vmul.u32.u64.compose %v86, %v85
    %v88 = vextract.low.u32 %v87
    %v89 = vextract.high.u32 %v87
    %v90 = vmul.u32.u64.compose %v86, %v81
    %v91 = vextract.low.u32 %v90
    %v92 = vextract.high.u32 %v90
    %v93 = vmul.u32 %v86, %v77
    %v94 = vadd.s32 %v89, %v91
    %vm95 = vc.u32 %v89, %v91
    %v96 = vadd.s32 %v92, 1
    %v97 = vsel %vm95, %v96, %v92
    %v98 = vadd.s32 %v93, %v97
    %v99 = vadd.s32 %v98, 536870912
    %v100 = vshrl.u32 %v99, 30
    %v101 = vshll.u32 %v100, 30
    %v102 = vsub.s32 %v98, %v101
    %vm103 = vcmp.lt.s32.totalorder %v102, 0
    %v104 = vsub.s32 0, %v102
    %v105 = vsel %vm103, %v104, %v102
    %v106 = vclz %v105
    %v107 = vsub.s32 %v106, 2
    %vm108 = vcmp.gt.s32.totalorder 0, %v107
    %v109 = vsel %vm108, 0, %v107
    %v110 = vsub.s32 32, %v109
    %v111 = vshll.u32 %v102, %v109
    %v112 = vshrl.u32 %v94, %v110
    %v113 = vor.u32 %v111, %v112
    %v114 = vsub.s32 4294967266, %v109
    %v115 = vadd.s32 %v114, 127
    %v116 = vshll.u32 %v115, 23
    %v117 = vor.u32 4788187, %v116
    %v118 = vand.u32 2147483647, %v117
    %v120 = vcvt.s32.f32 %v113
    %v121 = vmul.f32 %v120, %v118
    %v122 = vxor.u32 %v121, 2147483648
    %v123 = vsel %vm40, %v122, %v121
    %v124 = vsub.s32 4, %v100
    %v125 = vsel %vm40, %v124, %v100
    %v126 = vsel %vm39, %v37, %v123
    %v127 = vsel %vm39, 0, %v125
    %v128 = vcosq.f32.pop %v126
    %v129 = vsinq.f32.pop %v126
    %vm130 = vweird.f32 %v37
    %v131 = vand.u32 %v127, 3
    %vm132 = vcmp.lt.s32.totalorder %v131, 2
    %vm133 = vcmp.eq.s32.totalorder %v131, 0
    %v134 = vxor.u32 %v129, 2147483648
    %v135 = vsel %vm133, %v128, %v134
    %vm136 = vcmp.eq.s32.totalorder %v131, 2
    %v137 = vxor.u32 %v128, 2147483648
    %v138 = vsel %vm136, %v137, %v129
    %v139 = vsel %vm132, %v135, %v138
    %v140 = vsel %vm130, nan, %v139
    %v141 = vpack.c.bf16 %v140, %v140
    %v142 = vand.u32 2147483647, %v37
    %vm143 = vcmp.le.f32.partialorder %v142, 0.7853982
    %vm144 = vcmp.lt.s32.totalorder %v37, 0
    %v145 = vand.u32 %v37, 2139095040
    %v146 = vshrl.u32 %v145, 23
    %v147 = vsub.s32 %v146, 127
    %v148 = vand.u32 2147483647, %v37
    %v149 = vand.u32 %v148, 8388607
    %v150 = vor.u32 %v149, 8388608
    %v151 = vsub.s32 0, %v150
    %v152 = vadd.s32 %v147, 1
    %vm153 = vcmp.gt.s32.totalorder %v152, 0
    %v154 = vsel %vm153, %v152, 0
    %v155 = vshrl.u32 %v154, 5
    %v156 = vand.u32 %v154, 31
    %v157 = vsub.s32 32, %v156
    %v158 = vshrl.u32 683565275, %v157
    %v159 = vshll.u32 683565275, %v156
    %v160 = vshrl.u32 2475754826, %v157
    %v161 = vor.u32 %v159, %v160
    %v162 = vshll.u32 2475754826, %v156
    %v163 = vshrl.u32 2131351028, %v157
    %v164 = vor.u32 %v162, %v163
    %v165 = vshll.u32 2131351028, %v156
    %v166 = vshrl.u32 2102212464, %v157
    %v167 = vor.u32 %v165, %v166
    %v168 = vshll.u32 2102212464, %v156
    %v169 = vshrl.u32 920167782, %v157
    %v170 = vor.u32 %v168, %v169
    %v171 = vshll.u32 920167782, %v156
    %v172 = vshrl.u32 1326507024, %v157
    %v173 = vor.u32 %v171, %v172
    %vm174 = vcmp.lt.s32.totalorder %v155, 1
    %vm175 = vcmp.lt.s32.totalorder %v155, 2
    %vm176 = vcmp.lt.s32.totalorder %v155, 3
    %vm177 = vcmp.lt.s32.totalorder %v155, 4
    %v178 = vsel %vm174, %v158, %v161
    %v179 = vsel %vm177, %v167, 2102212464
    %v180 = vsel %vm176, %v164, %v179
    %v181 = vsel %vm175, %v178, %v180
    %v182 = vsel %vm174, %v161, %v164
    %v183 = vsel %vm177, %v170, 920167782
    %v184 = vsel %vm176, %v167, %v183
    %v185 = vsel %vm175, %v182, %v184
    %v186 = vsel %vm174, %v164, %v167
    %v187 = vsel %vm177, %v173, 1326507024
    %v188 = vsel %vm176, %v170, %v187
    %v189 = vsel %vm175, %v186, %v188
    %v190 = vshll.u32 %v150, 8
    %v191 = vmul.u32.u64.compose %v190, %v189
    %v192 = vextract.low.u32 %v191
    %v193 = vextract.high.u32 %v191
    %v194 = vmul.u32.u64.compose %v190, %v185
    %v195 = vextract.low.u32 %v194
    %v196 = vextract.high.u32 %v194
    %v197 = vmul.u32 %v190, %v181
    %v198 = vadd.s32 %v193, %v195
    %vm199 = vc.u32 %v193, %v195
    %v200 = vadd.s32 %v196, 1
    %v201 = vsel %vm199, %v200, %v196
    %v202 = vadd.s32 %v197, %v201
    %v203 = vadd.s32 %v202, 536870912
    %v204 = vshrl.u32 %v203, 30
    %v205 = vshll.u32 %v204, 30
    %v206 = vsub.s32 %v202, %v205
    %vm207 = vcmp.lt.s32.totalorder %v206, 0
    %v208 = vsub.s32 0, %v206
    %v209 = vsel %vm207, %v208, %v206
    %v210 = vclz %v209
    %v211 = vsub.s32 %v210, 2
    %vm212 = vcmp.gt.s32.totalorder 0, %v211
    %v213 = vsel %vm212, 0, %v211
    %v214 = vsub.s32 32, %v213
    %v215 = vshll.u32 %v206, %v213
    %v216 = vshrl.u32 %v198, %v214
    %v217 = vor.u32 %v215, %v216
    %v218 = vsub.s32 4294967266, %v213
    %v219 = vadd.s32 %v218, 127
    %v220 = vshll.u32 %v219, 23
    %v221 = vor.u32 4788187, %v220
    %v222 = vand.u32 2147483647, %v221
    %v224 = vcvt.s32.f32 %v217
    %v225 = vmul.f32 %v224, %v222
    %v226 = vxor.u32 %v225, 2147483648
    %v227 = vsel %vm144, %v226, %v225
    %v228 = vsub.s32 4, %v204
    %v229 = vsel %vm144, %v228, %v204
    %v230 = vsel %vm143, %v37, %v227
    %v231 = vsel %vm143, 0, %v229
    %v232 = vcosq.f32.pop %v230
    %v233 = vsinq.f32.pop %v230
    %vm234 = vweird.f32 %v37
    %v235 = vadd.s32 %v231, 3
    %v236 = vand.u32 %v235, 3
    %vm237 = vcmp.lt.s32.totalorder %v236, 2
    %vm238 = vcmp.eq.s32.totalorder %v236, 0
    %v239 = vxor.u32 %v233, 2147483648
    %v240 = vsel %vm238, %v232, %v239
    %vm241 = vcmp.eq.s32.totalorder %v236, 2
    %v242 = vxor.u32 %v232, 2147483648
    %v243 = vsel %vm241, %v242, %v233
    %v244 = vsel %vm237, %v240, %v243
    %v245 = vsel %vm234, nan, %v244
    %v246 = vpack.c.bf16 %v245, %v245
    %v247 = vld [vmem:[%s1] sm:$0xf]
    %v248 = vld [vmem:[%s1 + $0x4] sm:$0xf]
    %v249 = vld [vmem:[%s1 + $0x8] sm:$0xf]
    %v250 = vld [vmem:[%s1 + $0xc] sm:$0xf]
    %v251 = vld [vmem:[%s1 + $0x10] sm:$0xf]
    %v252 = vld [vmem:[%s1 + $0x14] sm:$0xf]
    %v253 = vld [vmem:[%s1 + $0x18] sm:$0xf]
    %v254 = vld [vmem:[%s1 + $0x1c] sm:$0xf]
    %v255 = vld [vmem:[%s1 + $0x20] sm:$0xf]
    %v256 = vld [vmem:[%s1 + $0x24] sm:$0xf]
    %v257 = vld [vmem:[%s1 + $0x28] sm:$0xf]
    %v258 = vld [vmem:[%s1 + $0x2c] sm:$0xf]
    %v259 = vld [vmem:[%s1 + $0x30] sm:$0xf]
    %v260 = vld [vmem:[%s1 + $0x34] sm:$0xf]
    %v261 = vld [vmem:[%s1 + $0x38] sm:$0xf]
    %v262 = vld [vmem:[%s1 + $0x3c] sm:$0xf]
    %v263 = vld [vmem:[%s2] sm:$0xf]
    %v264 = vld [vmem:[%s2 + $0x4] sm:$0xf]
    %v265 = vld [vmem:[%s2 + $0x8] sm:$0xf]
    %v266 = vld [vmem:[%s2 + $0xc] sm:$0xf]
    %v267 = vld [vmem:[%s2 + $0x10] sm:$0xf]
    %v268 = vld [vmem:[%s2 + $0x14] sm:$0xf]
    %v269 = vld [vmem:[%s2 + $0x18] sm:$0xf]
    %v270 = vld [vmem:[%s2 + $0x1c] sm:$0xf]
    %v271 = vld [vmem:[%s2 + $0x20] sm:$0xf]
    %v272 = vld [vmem:[%s2 + $0x24] sm:$0xf]
    %v273 = vld [vmem:[%s2 + $0x28] sm:$0xf]
    %v274 = vld [vmem:[%s2 + $0x2c] sm:$0xf]
    %v275 = vld [vmem:[%s2 + $0x30] sm:$0xf]
    %v276 = vld [vmem:[%s2 + $0x34] sm:$0xf]
    %v277 = vld [vmem:[%s2 + $0x38] sm:$0xf]
    %v278 = vld [vmem:[%s2 + $0x3c] sm:$0xf]
    %v295 = vunpack.c.l.b16 %v263
    %v296 = vunpack.c.l.b16 %v264
    %v297 = vunpack.c.l.b16 %v265
    %v298 = vunpack.c.l.b16 %v266
    %v299 = vunpack.c.l.b16 %v267
    %v300 = vunpack.c.l.b16 %v268
    %v301 = vunpack.c.l.b16 %v269
    %v302 = vunpack.c.l.b16 %v270
    %v303 = vunpack.c.l.b16 %v271
    %v304 = vunpack.c.l.b16 %v272
    %v305 = vunpack.c.l.b16 %v273
    %v306 = vunpack.c.l.b16 %v274
    %v307 = vunpack.c.l.b16 %v275
    %v308 = vunpack.c.l.b16 %v276
    %v309 = vunpack.c.l.b16 %v277
    %v310 = vunpack.c.l.b16 %v278
    %v311 = vpack.c.b16 %v296, %v295
    %v312 = vpack.c.b16 %v298, %v297
    %v313 = vpack.c.b16 %v300, %v299
    %v314 = vpack.c.b16 %v302, %v301
    %v315 = vpack.c.b16 %v304, %v303
    %v316 = vpack.c.b16 %v306, %v305
    %v317 = vpack.c.b16 %v308, %v307
    %v318 = vpack.c.b16 %v310, %v309
    %327 = vmatprep.subr.bf16.mxu0 0
    %328 = vmatpush1.bf16.msra.mxu0 %v311
    %329 = vmatprep.subr.bf16.mxu0 0
    %330 = vmatpush1.bf16.msra.mxu0 %v312
    %331 = vmatprep.subr.bf16.mxu0 0
    %332 = vmatpush1.bf16.msra.mxu0 %v313
    %333 = vmatprep.subr.bf16.mxu0 0
    %334 = vmatpush1.bf16.msra.mxu0 %v314
    %335 = vmatprep.subr.bf16.mxu0 0
    %336 = vmatpush1.bf16.msra.mxu0 %v315
    %337 = vmatprep.subr.bf16.mxu0 0
    %338 = vmatpush1.bf16.msra.mxu0 %v316
    %339 = vmatprep.subr.bf16.mxu0 0
    %340 = vmatpush1.bf16.msra.mxu0 %v317
    %341 = vmatprep.subr.bf16.mxu0 0
    %342 = vmatpush1.bf16.msra.mxu0 %v318
    %343 = vmatprep.subr.bf16.mxu0 0
    %344 = vmatpush1.bf16.msra.mxu0 0
    %345 = vmatprep.subr.bf16.mxu0 0
    %346 = vmatpush1.bf16.msra.mxu0 0
    %347 = vmatprep.subr.bf16.mxu0 0
    %348 = vmatpush1.bf16.msra.mxu0 0
    %349 = vmatprep.subr.bf16.mxu0 0
    %350 = vmatpush1.bf16.msra.mxu0 0
    %351 = vmatprep.subr.bf16.mxu0 0
    %352 = vmatpush1.bf16.msra.mxu0 0
    %353 = vmatprep.subr.bf16.mxu0 0
    %354 = vmatpush1.bf16.msra.mxu0 0
    %355 = vmatprep.subr.bf16.mxu0 0
    %356 = vmatpush1.bf16.msra.mxu0 0
    %357 = vmatprep.subr.bf16.mxu0 0
    %358 = vmatpush1.bf16.msra.mxu0 0
    %359 = vmatprep.mubr.bf16.mxu0 0
    %360 = vmatmul.mubr.bf16.gmra.mrb[0].mxu0 %v246
    %v361 = vpop.f32.mrb[0].mxu0
    %v362 = vadd.f32 0.0, %v361
    %v363 = vpop.f32.mrb[0].mxu0
    %v364 = vpop.f32.mrb[0].mxu0
    %v365 = vpop.f32.mrb[0].mxu0
    %366 = vdwg.mxu0
    %v383 = vunpack.c.l.b16 %v247
    %v384 = vunpack.c.l.b16 %v248
    %v385 = vunpack.c.l.b16 %v249
    %v386 = vunpack.c.l.b16 %v250
    %v387 = vunpack.c.l.b16 %v251
    %v388 = vunpack.c.l.b16 %v252
    %v389 = vunpack.c.l.b16 %v253
    %v390 = vunpack.c.l.b16 %v254
    %v391 = vunpack.c.l.b16 %v255
    %v392 = vunpack.c.l.b16 %v256
    %v393 = vunpack.c.l.b16 %v257
    %v394 = vunpack.c.l.b16 %v258
    %v395 = vunpack.c.l.b16 %v259
    %v396 = vunpack.c.l.b16 %v260
    %v397 = vunpack.c.l.b16 %v261
    %v398 = vunpack.c.l.b16 %v262
    %v399 = vpack.c.b16 %v384, %v383
    %v400 = vpack.c.b16 %v386, %v385
    %v401 = vpack.c.b16 %v388, %v387
    %v402 = vpack.c.b16 %v390, %v389
    %v403 = vpack.c.b16 %v392, %v391
    %v404 = vpack.c.b16 %v394, %v393
    %v405 = vpack.c.b16 %v396, %v395
    %v406 = vpack.c.b16 %v398, %v397
    %415 = vmatprep.subr.bf16.mxu0 0
    %416 = vmatpush1.bf16.msra.mxu0 %v399
    %417 = vmatprep.subr.bf16.mxu0 0
    %418 = vmatpush1.bf16.msra.mxu0 %v400
    %419 = vmatprep.subr.bf16.mxu0 0
    %420 = vmatpush1.bf16.msra.mxu0 %v401
    %421 = vmatprep.subr.bf16.mxu0 0
    %422 = vmatpush1.bf16.msra.mxu0 %v402
    %423 = vmatprep.subr.bf16.mxu0 0
    %424 = vmatpush1.bf16.msra.mxu0 %v403
    %425 = vmatprep.subr.bf16.mxu0 0
    %426 = vmatpush1.bf16.msra.mxu0 %v404
    %427 = vmatprep.subr.bf16.mxu0 0
    %428 = vmatpush1.bf16.msra.mxu0 %v405
    %429 = vmatprep.subr.bf16.mxu0 0
    %430 = vmatpush1.bf16.msra.mxu0 %v406
    %431 = vmatprep.subr.bf16.mxu0 0
    %432 = vmatpush1.bf16.msra.mxu0 0
    %433 = vmatprep.subr.bf16.mxu0 0
    %434 = vmatpush1.bf16.msra.mxu0 0
    %435 = vmatprep.subr.bf16.mxu0 0
    %436 = vmatpush1.bf16.msra.mxu0 0
    %437 = vmatprep.subr.bf16.mxu0 0
    %438 = vmatpush1.bf16.msra.mxu0 0
    %439 = vmatprep.subr.bf16.mxu0 0
    %440 = vmatpush1.bf16.msra.mxu0 0
    %441 = vmatprep.subr.bf16.mxu0 0
    %442 = vmatpush1.bf16.msra.mxu0 0
    %443 = vmatprep.subr.bf16.mxu0 0
    %444 = vmatpush1.bf16.msra.mxu0 0
    %445 = vmatprep.subr.bf16.mxu0 0
    %446 = vmatpush1.bf16.msra.mxu0 0
    %447 = vmatprep.mubr.bf16.mxu0 0
    %448 = vmatmul.mubr.bf16.gmra.mrb[0].mxu0 %v141
    %v449 = vpop.f32.mrb[0].mxu0
    %v450 = vadd.f32 %v362, %v449
    %v451 = vpop.f32.mrb[0].mxu0
    %v452 = vpop.f32.mrb[0].mxu0
    %v453 = vpop.f32.mrb[0].mxu0
    %454 = vdwg.mxu0
    %v455 = vld [vmem:[%s3] sm:$0x1]
    %v457 = vlaneseq
    %v458 = vshrl.u32 %v457, 7
    %v459 = vsub.s32 0, %v458
    %v460 = vrot.slane %v455, %v459
    %v462 = vadd.f32 %v450, %v460
    %v463 = vxor.u32 %v462, 2147483648
    %v464 = vmul.f32 %v463, 1.442695
    %v465 = vpow.pop %v464
    %v466 = vadd.f32 %v465, 1.0
    %v467 = vrcp.pop %v466
    %v468 = vmul.f32 1.0, %v467
    %v469 = vmul.f32 %v462, %v468
    %v470 = vpack.c.bf16 %v469, %v469
    %v471 = vld [vmem:[%s4] sm:$0xf]
    %v472 = vld [vmem:[%s4 + $0x4] sm:$0xf]
    %v473 = vld [vmem:[%s4 + $0x8] sm:$0xf]
    %v474 = vld [vmem:[%s4 + $0xc] sm:$0xf]
    %v475 = vld [vmem:[%s5] sm:$0x1]
    %v477 = vlaneseq
    %v478 = vshrl.u32 %v477, 7
    %v479 = vsub.s32 0, %v478
    %v480 = vrot.slane %v475, %v479
    %v486 = vunpack.c.l.b16 %v471
    %v487 = vunpack.c.l.b16 %v472
    %v488 = vunpack.c.l.b16 %v473
    %v489 = vunpack.c.l.b16 %v474
    %v490 = vpack.c.b16 %v487, %v486
    %v491 = vpack.c.b16 %v489, %v488
    %vm494 = vcmask 261120
    %v496 = vsel %vm494, %v470, 0
    %498 = vmatprep.subr.bf16.mxu0 0
    %499 = vmatpush1.bf16.msra.mxu0 %v490
    %500 = vmatprep.subr.bf16.mxu0 0
    %501 = vmatpush1.bf16.msra.mxu0 %v491
    %502 = vmatprep.subr.bf16.mxu0 0
    %503 = vmatpush1.bf16.msra.mxu0 0
    %504 = vmatprep.subr.bf16.mxu0 0
    %505 = vmatpush1.bf16.msra.mxu0 0
    %506 = vmatprep.subr.bf16.mxu0 0
    %507 = vmatpush1.bf16.msra.mxu0 0
    %508 = vmatprep.subr.bf16.mxu0 0
    %509 = vmatpush1.bf16.msra.mxu0 0
    %510 = vmatprep.subr.bf16.mxu0 0
    %511 = vmatpush1.bf16.msra.mxu0 0
    %512 = vmatprep.subr.bf16.mxu0 0
    %513 = vmatpush1.bf16.msra.mxu0 0
    %514 = vmatprep.subr.bf16.mxu0 0
    %515 = vmatpush1.bf16.msra.mxu0 0
    %516 = vmatprep.subr.bf16.mxu0 0
    %517 = vmatpush1.bf16.msra.mxu0 0
    %518 = vmatprep.subr.bf16.mxu0 0
    %519 = vmatpush1.bf16.msra.mxu0 0
    %520 = vmatprep.subr.bf16.mxu0 0
    %521 = vmatpush1.bf16.msra.mxu0 0
    %522 = vmatprep.subr.bf16.mxu0 0
    %523 = vmatpush1.bf16.msra.mxu0 0
    %524 = vmatprep.subr.bf16.mxu0 0
    %525 = vmatpush1.bf16.msra.mxu0 0
    %526 = vmatprep.subr.bf16.mxu0 0
    %527 = vmatpush1.bf16.msra.mxu0 0
    %528 = vmatprep.subr.bf16.mxu0 0
    %529 = vmatpush1.bf16.msra.mxu0 0
    %530 = vmatprep.mubr.bf16.mxu0 0
    %531 = vmatmul.mubr.bf16.gmra.mrb[0].mxu0 %v496
    %v532 = vpop.f32.mrb[0].mxu0
    %v533 = vadd.f32 %v480, %v532
    %v534 = vpop.f32.mrb[0].mxu0
    %v535 = vpop.f32.mrb[0].mxu0
    %v536 = vpop.f32.mrb[0].mxu0
    %537 = vdwg.mxu0
    %538 = vst [vmem:[#allocation2] sm:$0xff] %v533
    // Predicated region
    $region26: #{tpu_custom_call.1} parent=1 // pred_check
      _
    $region27: #{tpu_custom_call.1} parent=1 // pred_check_branch
      %540 = sbr.rel (0) target = $region29
    $region28: #{tpu_custom_call.1} parent=1 // pred_region
      %s542 = ssub.s32 128, 128
      %543 = vsyncadd [#allocation3], %s542
      %s545 = sshll.u32 [#allocation2], 4
      %s546 = int_to_ptr.vmem [resolvable:$true] %s545
      %548 = dma.vmem_to_hbm [thread:$0]  %s546, 128, %s6, [#allocation3]
    $region29: #{tpu_custom_call.1} parent=1 // pred_fallthru
      _
    // Predicated region
    $region30: #{tpu_custom_call.1} parent=1 // pred_check
      _
    $region31: #{tpu_custom_call.1} parent=1 // pred_check_branch
      %550 = sbr.rel (0) target = $region33
    $region32: #{tpu_custom_call.1} parent=1 // pred_region
      %551 = dma.done [#allocation3], 128
    $region33: #{tpu_custom_call.1} parent=1 // pred_fallthru
      _
    %552 = vsyncpa [#allocation3], 1

// kernel: tpu_custom_call.1
$region0: #{tpu_custom_call.1}
  #allocation0 [shape = 'u32[]', space=smem, size = 0x4, offset = 0x4, fixed_abs, tag = 'smem constant byte address 0x4 - core index']
  #allocation1 [shape = 'u32[144,128]{1,0:T(1,128)}', space=vmem, size = 0x12000, scoped, tag = 'internal scratch']
  %s0 = inlined_call_operand.vmem [shape: f32[8,1], index: 0, kind: input, shape index: {}]
  %s1 = inlined_call_operand.vmem [shape: bf16[128,32], index: 1, kind: input, shape index: {}]
  %s2 = inlined_call_operand.vmem [shape: bf16[128,32], index: 2, kind: input, shape index: {}]
  %s3 = inlined_call_operand.vmem [shape: f32[1,32], index: 3, kind: input, shape index: {}]
  %s4 = inlined_call_operand.vmem [shape: bf16[32,128], index: 4, kind: input, shape index: {}]
  %s5 = inlined_call_operand.vmem [shape: f32[1,128], index: 5, kind: input, shape index: {}]
  %s6 = inlined_call_operand.hbm [shape: f32[8,128], index: 6, kind: output, shape index: {}]
  %s7 = sld [smem:[#allocation0]]
  $region34: #{tpu_custom_call.1} parent=0
    _
  %s9 = ssub.s32 1, %s7
  %s10 = scalar_select 0, %s9, %s7
  $region1: #{tpu_custom_call.1} parent=0
    #allocation2 [shape = 'u8[4096]{0}', space=vmem, size = 0x1000, scoped, tag = 'output window, operand 0, single buffered']
    #allocation3 [shape = 's32[1]{0}', space=sflag, size = 0x4, scoped, tag = 'scoped memory for tpu_custom_call.1']
    %11 = vsyncpa [#allocation3], 0
    // Predicated region
    $region2: #{tpu_custom_call.1} parent=1 // pred_check
      _
    $region3: #{tpu_custom_call.1} parent=1 // pred_check_branch
      %13 = sbr.rel (0) target = $region5
    $region4: #{tpu_custom_call.1} parent=1 // pred_region
      _
    $region5: #{tpu_custom_call.1} parent=1 // pred_fallthru
      _
    // Predicated region
    $region6: #{tpu_custom_call.1} parent=1 // pred_check
      _
    $region7: #{tpu_custom_call.1} parent=1 // pred_check_branch
      %15 = sbr.rel (0) target = $region9
    $region8: #{tpu_custom_call.1} parent=1 // pred_region
      _
    $region9: #{tpu_custom_call.1} parent=1 // pred_fallthru
      _
    // Predicated region
    $region10: #{tpu_custom_call.1} parent=1 // pred_check
      _
    $region11: #{tpu_custom_call.1} parent=1 // pred_check_branch
      %17 = sbr.rel (0) target = $region13
    $region12: #{tpu_custom_call.1} parent=1 // pred_region
      _
    $region13: #{tpu_custom_call.1} parent=1 // pred_fallthru
      _
    // Predicated region
    $region14: #{tpu_custom_call.1} parent=1 // pred_check
      _
    $region15: #{tpu_custom_call.1} parent=1 // pred_check_branch
      %19 = sbr.rel (0) target = $region17
    $region16: #{tpu_custom_call.1} parent=1 // pred_region
      _
    $region17: #{tpu_custom_call.1} parent=1 // pred_fallthru
      _
    // Predicated region
    $region18: #{tpu_custom_call.1} parent=1 // pred_check
      _
    $region19: #{tpu_custom_call.1} parent=1 // pred_check_branch
      %21 = sbr.rel (0) target = $region21
    $region20: #{tpu_custom_call.1} parent=1 // pred_region
      _
    $region21: #{tpu_custom_call.1} parent=1 // pred_fallthru
      _
    // Predicated region
    $region22: #{tpu_custom_call.1} parent=1 // pred_check
      _
    $region23: #{tpu_custom_call.1} parent=1 // pred_check_branch
      %23 = sbr.rel (0) target = $region25
    $region24: #{tpu_custom_call.1} parent=1 // pred_region
      _
    $region25: #{tpu_custom_call.1} parent=1 // pred_fallthru
      _
    %v25 = vlaneseq
    %v26 = vand.u32 %v25, 127
    %v27 = vcvt.s32.f32 %v26
    %v28 = vmul.f32 %v27, -0.071955785
    %v29 = vmul.f32 %v28, 1.442695
    %v30 = vpow.pop %v29
    %v31 = vld [vmem:[%s0] sm:$0xff]
    %33 = vset.pattern.permute.xlu0 0
    %34 = vperm.xlu0 %33, %v31
    %v35 = vpop.permute.xlu0 %34
    %v37 = vmul.f32 %v35, %v30
    %v38 = vand.u32 2147483647, %v37
    %vm39 = vcmp.le.f32.partialorder %v38, 0.7853982
    %vm40 = vcmp.lt.s32.totalorder %v37, 0
    %v41 = vand.u32 %v37, 2139095040
    %v42 = vshrl.u32 %v41, 23
    %v43 = vsub.s32 %v42, 127
    %v44 = vand.u32 2147483647, %v37
    %v45 = vand.u32 %v44, 8388607
    %v46 = vor.u32 %v45, 8388608
    %v47 = vsub.s32 0, %v46
    %v48 = vadd.s32 %v43, 1
    %vm49 = vcmp.gt.s32.totalorder %v48, 0
    %v50 = vsel %vm49, %v48, 0
    %v51 = vshrl.u32 %v50, 5
    %v52 = vand.u32 %v50, 31
    %v53 = vsub.s32 32, %v52
    %v54 = vshrl.u32 683565275, %v53
    %v55 = vshll.u32 683565275, %v52
    %v56 = vshrl.u32 2475754826, %v53
    %v57 = vor.u32 %v55, %v56
    %v58 = vshll.u32 2475754826, %v52
    %v59 = vshrl.u32 2131351028, %v53
    %v60 = vor.u32 %v58, %v59
    %v61 = vshll.u32 2131351028, %v52
    %v62 = vshrl.u32 2102212464, %v53
    %v63 = vor.u32 %v61, %v62
    %v64 = vshll.u32 2102212464, %v52
    %v65 = vshrl.u32 920167782, %v53
    %v66 = vor.u32 %v64, %v65
    %v67 = vshll.u32 920167782, %v52
    %v68 = vshrl.u32 1326507024, %v53
    %v69 = vor.u32 %v67, %v68
    %vm70 = vcmp.lt.s32.totalorder %v51, 1
    %vm71 = vcmp.lt.s32.totalorder %v51, 2
    %vm72 = vcmp.lt.s32.totalorder %v51, 3
    %vm73 = vcmp.lt.s32.totalorder %v51, 4
    %v74 = vsel %vm70, %v54, %v57
    %v75 = vsel %vm73, %v63, 2102212464
    %v76 = vsel %vm72, %v60, %v75
    %v77 = vsel %vm71, %v74, %v76
    %v78 = vsel %vm70, %v57, %v60
    %v79 = vsel %vm73, %v66, 920167782
    %v80 = vsel %vm72, %v63, %v79
    %v81 = vsel %vm71, %v78, %v80
    %v82 = vsel %vm70, %v60, %v63
    %v83 = vsel %vm73, %v69, 1326507024
    %v84 = vsel %vm72, %v66, %v83
    %v85 = vsel %vm71, %v82, %v84
    %v86 = vshll.u32 %v46, 8
    %v87 = vmul.u32.u64.compose %v86, %v85
    %v88 = vextract.low.u32 %v87
    %v89 = vextract.high.u32 %v87
    %v90 = vmul.u32.u64.compose %v86, %v81
    %v91 = vextract.low.u32 %v90
    %v92 = vextract.high.u32 %v90
    %v93 = vmul.u32 %v86, %v77
    %v94 = vadd.s32 %v89, %v91
    %vm95 = vc.u32 %v89, %v91
    %v96 = vadd.s32 %v92, 1
    %v97 = vsel %vm95, %v96, %v92
    %v98 = vadd.s32 %v93, %v97
    %v99 = vadd.s32 %v98, 536870912
    %v100 = vshrl.u32 %v99, 30
    %v101 = vshll.u32 %v100, 30
    %v102 = vsub.s32 %v98, %v101
    %vm103 = vcmp.lt.s32.totalorder %v102, 0
    %v104 = vsub.s32 0, %v102
    %v105 = vsel %vm103, %v104, %v102
    %v106 = vclz %v105
    %v107 = vsub.s32 %v106, 2
    %vm108 = vcmp.gt.s32.totalorder 0, %v107
    %v109 = vsel %vm108, 0, %v107
    %v110 = vsub.s32 32, %v109
    %v111 = vshll.u32 %v102, %v109
    %v112 = vshrl.u32 %v94, %v110
    %v113 = vor.u32 %v111, %v112
    %v114 = vsub.s32 4294967266, %v109
    %v115 = vadd.s32 %v114, 127
    %v116 = vshll.u32 %v115, 23
    %v117 = vor.u32 4788187, %v116
    %v118 = vand.u32 2147483647, %v117
    %v120 = vcvt.s32.f32 %v113
    %v121 = vmul.f32 %v120, %v118
    %v122 = vxor.u32 %v121, 2147483648
    %v123 = vsel %vm40, %v122, %v121
    %v124 = vsub.s32 4, %v100
    %v125 = vsel %vm40, %v124, %v100
    %v126 = vsel %vm39, %v37, %v123
    %v127 = vsel %vm39, 0, %v125
    %v128 = vcosq.f32.pop %v126
    %v129 = vsinq.f32.pop %v126
    %vm130 = vweird.f32 %v37
    %v131 = vand.u32 %v127, 3
    %vm132 = vcmp.lt.s32.totalorder %v131, 2
    %vm133 = vcmp.eq.s32.totalorder %v131, 0
    %v134 = vxor.u32 %v129, 2147483648
    %v135 = vsel %vm133, %v128, %v134
    %vm136 = vcmp.eq.s32.totalorder %v131, 2
    %v137 = vxor.u32 %v128, 2147483648
    %v138 = vsel %vm136, %v137, %v129
    %v139 = vsel %vm132, %v135, %v138
    %v140 = vsel %vm130, nan, %v139
    %v141 = vpack.c.bf16 %v140, %v140
    %v142 = vand.u32 2147483647, %v37
    %vm143 = vcmp.le.f32.partialorder %v142, 0.7853982
    %vm144 = vcmp.lt.s32.totalorder %v37, 0
    %v145 = vand.u32 %v37, 2139095040
    %v146 = vshrl.u32 %v145, 23
    %v147 = vsub.s32 %v146, 127
    %v148 = vand.u32 2147483647, %v37
    %v149 = vand.u32 %v148, 8388607
    %v150 = vor.u32 %v149, 8388608
    %v151 = vsub.s32 0, %v150
    %v152 = vadd.s32 %v147, 1
    %vm153 = vcmp.gt.s32.totalorder %v152, 0
    %v154 = vsel %vm153, %v152, 0
    %v155 = vshrl.u32 %v154, 5
    %v156 = vand.u32 %v154, 31
    %v157 = vsub.s32 32, %v156
    %v158 = vshrl.u32 683565275, %v157
    %v159 = vshll.u32 683565275, %v156
    %v160 = vshrl.u32 2475754826, %v157
    %v161 = vor.u32 %v159, %v160
    %v162 = vshll.u32 2475754826, %v156
    %v163 = vshrl.u32 2131351028, %v157
    %v164 = vor.u32 %v162, %v163
    %v165 = vshll.u32 2131351028, %v156
    %v166 = vshrl.u32 2102212464, %v157
    %v167 = vor.u32 %v165, %v166
    %v168 = vshll.u32 2102212464, %v156
    %v169 = vshrl.u32 920167782, %v157
    %v170 = vor.u32 %v168, %v169
    %v171 = vshll.u32 920167782, %v156
    %v172 = vshrl.u32 1326507024, %v157
    %v173 = vor.u32 %v171, %v172
    %vm174 = vcmp.lt.s32.totalorder %v155, 1
    %vm175 = vcmp.lt.s32.totalorder %v155, 2
    %vm176 = vcmp.lt.s32.totalorder %v155, 3
    %vm177 = vcmp.lt.s32.totalorder %v155, 4
    %v178 = vsel %vm174, %v158, %v161
    %v179 = vsel %vm177, %v167, 2102212464
    %v180 = vsel %vm176, %v164, %v179
    %v181 = vsel %vm175, %v178, %v180
    %v182 = vsel %vm174, %v161, %v164
    %v183 = vsel %vm177, %v170, 920167782
    %v184 = vsel %vm176, %v167, %v183
    %v185 = vsel %vm175, %v182, %v184
    %v186 = vsel %vm174, %v164, %v167
    %v187 = vsel %vm177, %v173, 1326507024
    %v188 = vsel %vm176, %v170, %v187
    %v189 = vsel %vm175, %v186, %v188
    %v190 = vshll.u32 %v150, 8
    %v191 = vmul.u32.u64.compose %v190, %v189
    %v192 = vextract.low.u32 %v191
    %v193 = vextract.high.u32 %v191
    %v194 = vmul.u32.u64.compose %v190, %v185
    %v195 = vextract.low.u32 %v194
    %v196 = vextract.high.u32 %v194
    %v197 = vmul.u32 %v190, %v181
    %v198 = vadd.s32 %v193, %v195
    %vm199 = vc.u32 %v193, %v195
    %v200 = vadd.s32 %v196, 1
    %v201 = vsel %vm199, %v200, %v196
    %v202 = vadd.s32 %v197, %v201
    %v203 = vadd.s32 %v202, 536870912
    %v204 = vshrl.u32 %v203, 30
    %v205 = vshll.u32 %v204, 30
    %v206 = vsub.s32 %v202, %v205
    %vm207 = vcmp.lt.s32.totalorder %v206, 0
    %v208 = vsub.s32 0, %v206
    %v209 = vsel %vm207, %v208, %v206
    %v210 = vclz %v209
    %v211 = vsub.s32 %v210, 2
    %vm212 = vcmp.gt.s32.totalorder 0, %v211
    %v213 = vsel %vm212, 0, %v211
    %v214 = vsub.s32 32, %v213
    %v215 = vshll.u32 %v206, %v213
    %v216 = vshrl.u32 %v198, %v214
    %v217 = vor.u32 %v215, %v216
    %v218 = vsub.s32 4294967266, %v213
    %v219 = vadd.s32 %v218, 127
    %v220 = vshll.u32 %v219, 23
    %v221 = vor.u32 4788187, %v220
    %v222 = vand.u32 2147483647, %v221
    %v224 = vcvt.s32.f32 %v217
    %v225 = vmul.f32 %v224, %v222
    %v226 = vxor.u32 %v225, 2147483648
    %v227 = vsel %vm144, %v226, %v225
    %v228 = vsub.s32 4, %v204
    %v229 = vsel %vm144, %v228, %v204
    %v230 = vsel %vm143, %v37, %v227
    %v231 = vsel %vm143, 0, %v229
    %v232 = vcosq.f32.pop %v230
    %v233 = vsinq.f32.pop %v230
    %vm234 = vweird.f32 %v37
    %v235 = vadd.s32 %v231, 3
    %v236 = vand.u32 %v235, 3
    %vm237 = vcmp.lt.s32.totalorder %v236, 2
    %vm238 = vcmp.eq.s32.totalorder %v236, 0
    %v239 = vxor.u32 %v233, 2147483648
    %v240 = vsel %vm238, %v232, %v239
    %vm241 = vcmp.eq.s32.totalorder %v236, 2
    %v242 = vxor.u32 %v232, 2147483648
    %v243 = vsel %vm241, %v242, %v233
    %v244 = vsel %vm237, %v240, %v243
    %v245 = vsel %vm234, nan, %v244
    %v246 = vpack.c.bf16 %v245, %v245
    %v247 = vld [vmem:[%s1] sm:$0xf]
    %v248 = vld [vmem:[%s1 + $0x4] sm:$0xf]
    %v249 = vld [vmem:[%s1 + $0x8] sm:$0xf]
    %v250 = vld [vmem:[%s1 + $0xc] sm:$0xf]
    %v251 = vld [vmem:[%s1 + $0x10] sm:$0xf]
    %v252 = vld [vmem:[%s1 + $0x14] sm:$0xf]
    %v253 = vld [vmem:[%s1 + $0x18] sm:$0xf]
    %v254 = vld [vmem:[%s1 + $0x1c] sm:$0xf]
    %v255 = vld [vmem:[%s1 + $0x20] sm:$0xf]
    %v256 = vld [vmem:[%s1 + $0x24] sm:$0xf]
    %v257 = vld [vmem:[%s1 + $0x28] sm:$0xf]
    %v258 = vld [vmem:[%s1 + $0x2c] sm:$0xf]
    %v259 = vld [vmem:[%s1 + $0x30] sm:$0xf]
    %v260 = vld [vmem:[%s1 + $0x34] sm:$0xf]
    %v261 = vld [vmem:[%s1 + $0x38] sm:$0xf]
    %v262 = vld [vmem:[%s1 + $0x3c] sm:$0xf]
    %v263 = vld [vmem:[%s2] sm:$0xf]
    %v264 = vld [vmem:[%s2 + $0x4] sm:$0xf]
    %v265 = vld [vmem:[%s2 + $0x8] sm:$0xf]
    %v266 = vld [vmem:[%s2 + $0xc] sm:$0xf]
    %v267 = vld [vmem:[%s2 + $0x10] sm:$0xf]
    %v268 = vld [vmem:[%s2 + $0x14] sm:$0xf]
    %v269 = vld [vmem:[%s2 + $0x18] sm:$0xf]
    %v270 = vld [vmem:[%s2 + $0x1c] sm:$0xf]
    %v271 = vld [vmem:[%s2 + $0x20] sm:$0xf]
    %v272 = vld [vmem:[%s2 + $0x24] sm:$0xf]
    %v273 = vld [vmem:[%s2 + $0x28] sm:$0xf]
    %v274 = vld [vmem:[%s2 + $0x2c] sm:$0xf]
    %v275 = vld [vmem:[%s2 + $0x30] sm:$0xf]
    %v276 = vld [vmem:[%s2 + $0x34] sm:$0xf]
    %v277 = vld [vmem:[%s2 + $0x38] sm:$0xf]
    %v278 = vld [vmem:[%s2 + $0x3c] sm:$0xf]
    %v295 = vunpack.c.l.b16 %v263
    %v296 = vunpack.c.l.b16 %v264
    %v297 = vunpack.c.l.b16 %v265
    %v298 = vunpack.c.l.b16 %v266
    %v299 = vunpack.c.l.b16 %v267
    %v300 = vunpack.c.l.b16 %v268
    %v301 = vunpack.c.l.b16 %v269
    %v302 = vunpack.c.l.b16 %v270
    %v303 = vunpack.c.l.b16 %v271
    %v304 = vunpack.c.l.b16 %v272
    %v305 = vunpack.c.l.b16 %v273
    %v306 = vunpack.c.l.b16 %v274
    %v307 = vunpack.c.l.b16 %v275
    %v308 = vunpack.c.l.b16 %v276
    %v309 = vunpack.c.l.b16 %v277
    %v310 = vunpack.c.l.b16 %v278
    %v311 = vpack.c.b16 %v296, %v295
    %v312 = vpack.c.b16 %v298, %v297
    %v313 = vpack.c.b16 %v300, %v299
    %v314 = vpack.c.b16 %v302, %v301
    %v315 = vpack.c.b16 %v304, %v303
    %v316 = vpack.c.b16 %v306, %v305
    %v317 = vpack.c.b16 %v308, %v307
    %v318 = vpack.c.b16 %v310, %v309
    %327 = vmatprep.subr.bf16.mxu0 0
    %328 = vmatpush1.bf16.msra.mxu0 %v311
    %329 = vmatprep.subr.bf16.mxu0 0
    %330 = vmatpush1.bf16.msra.mxu0 %v312
    %331 = vmatprep.subr.bf16.mxu0 0
    %332 = vmatpush1.bf16.msra.mxu0 %v313
    %333 = vmatprep.subr.bf16.mxu0 0
    %334 = vmatpush1.bf16.msra.mxu0 %v314
    %335 = vmatprep.subr.bf16.mxu0 0
    %336 = vmatpush1.bf16.msra.mxu0 %v315
    %337 = vmatprep.subr.bf16.mxu0 0
    %338 = vmatpush1.bf16.msra.mxu0 %v316
    %339 = vmatprep.subr.bf16.mxu0 0
    %340 = vmatpush1.bf16.msra.mxu0 %v317
    %341 = vmatprep.subr.bf16.mxu0 0
    %342 = vmatpush1.bf16.msra.mxu0 %v318
    %343 = vmatprep.subr.bf16.mxu0 0
    %344 = vmatpush1.bf16.msra.mxu0 0
    %345 = vmatprep.subr.bf16.mxu0 0
    %346 = vmatpush1.bf16.msra.mxu0 0
    %347 = vmatprep.subr.bf16.mxu0 0
    %348 = vmatpush1.bf16.msra.mxu0 0
    %349 = vmatprep.subr.bf16.mxu0 0
    %350 = vmatpush1.bf16.msra.mxu0 0
    %351 = vmatprep.subr.bf16.mxu0 0
    %352 = vmatpush1.bf16.msra.mxu0 0
    %353 = vmatprep.subr.bf16.mxu0 0
    %354 = vmatpush1.bf16.msra.mxu0 0
    %355 = vmatprep.subr.bf16.mxu0 0
    %356 = vmatpush1.bf16.msra.mxu0 0
    %357 = vmatprep.subr.bf16.mxu0 0
    %358 = vmatpush1.bf16.msra.mxu0 0
    %359 = vmatprep.mubr.bf16.mxu0 0
    %360 = vmatmul.mubr.bf16.gmra.mrb[0].mxu0 %v246
    %v361 = vpop.f32.mrb[0].mxu0
    %v362 = vadd.f32 0.0, %v361
    %v363 = vpop.f32.mrb[0].mxu0
    %v364 = vpop.f32.mrb[0].mxu0
    %v365 = vpop.f32.mrb[0].mxu0
    %366 = vdwg.mxu0
    %v383 = vunpack.c.l.b16 %v247
    %v384 = vunpack.c.l.b16 %v248
    %v385 = vunpack.c.l.b16 %v249
    %v386 = vunpack.c.l.b16 %v250
    %v387 = vunpack.c.l.b16 %v251
    %v388 = vunpack.c.l.b16 %v252
    %v389 = vunpack.c.l.b16 %v253
    %v390 = vunpack.c.l.b16 %v254
    %v391 = vunpack.c.l.b16 %v255
    %v392 = vunpack.c.l.b16 %v256
    %v393 = vunpack.c.l.b16 %v257
    %v394 = vunpack.c.l.b16 %v258
    %v395 = vunpack.c.l.b16 %v259
    %v396 = vunpack.c.l.b16 %v260
    %v397 = vunpack.c.l.b16 %v261
    %v398 = vunpack.c.l.b16 %v262
    %v399 = vpack.c.b16 %v384, %v383
    %v400 = vpack.c.b16 %v386, %v385
    %v401 = vpack.c.b16 %v388, %v387
    %v402 = vpack.c.b16 %v390, %v389
    %v403 = vpack.c.b16 %v392, %v391
    %v404 = vpack.c.b16 %v394, %v393
    %v405 = vpack.c.b16 %v396, %v395
    %v406 = vpack.c.b16 %v398, %v397
    %415 = vmatprep.subr.bf16.mxu0 0
    %416 = vmatpush1.bf16.msra.mxu0 %v399
    %417 = vmatprep.subr.bf16.mxu0 0
    %418 = vmatpush1.bf16.msra.mxu0 %v400
    %419 = vmatprep.subr.bf16.mxu0 0
    %420 = vmatpush1.bf16.msra.mxu0 %v401
    %421 = vmatprep.subr.bf16.mxu0 0
    %422 = vmatpush1.bf16.msra.mxu0 %v402
    %423 = vmatprep.subr.bf16.mxu0 0
    %424 = vmatpush1.bf16.msra.mxu0 %v403
    %425 = vmatprep.subr.bf16.mxu0 0
    %426 = vmatpush1.bf16.msra.mxu0 %v404
    %427 = vmatprep.subr.bf16.mxu0 0
    %428 = vmatpush1.bf16.msra.mxu0 %v405
    %429 = vmatprep.subr.bf16.mxu0 0
    %430 = vmatpush1.bf16.msra.mxu0 %v406
    %431 = vmatprep.subr.bf16.mxu0 0
    %432 = vmatpush1.bf16.msra.mxu0 0
    %433 = vmatprep.subr.bf16.mxu0 0
    %434 = vmatpush1.bf16.msra.mxu0 0
    %435 = vmatprep.subr.bf16.mxu0 0
    %436 = vmatpush1.bf16.msra.mxu0 0
    %437 = vmatprep.subr.bf16.mxu0 0
    %438 = vmatpush1.bf16.msra.mxu0 0
    %439 = vmatprep.subr.bf16.mxu0 0
    %440 = vmatpush1.bf16.msra.mxu0 0
    %441 = vmatprep.subr.bf16.mxu0 0
    %442 = vmatpush1.bf16.msra.mxu0 0
    %443 = vmatprep.subr.bf16.mxu0 0
    %444 = vmatpush1.bf16.msra.mxu0 0
    %445 = vmatprep.subr.bf16.mxu0 0
    %446 = vmatpush1.bf16.msra.mxu0 0
    %447 = vmatprep.mubr.bf16.mxu0 0
    %448 = vmatmul.mubr.bf16.gmra.mrb[0].mxu0 %v141
    %v449 = vpop.f32.mrb[0].mxu0
    %v450 = vadd.f32 %v362, %v449
    %v451 = vpop.f32.mrb[0].mxu0
    %v452 = vpop.f32.mrb[0].mxu0
    %v453 = vpop.f32.mrb[0].mxu0
    %454 = vdwg.mxu0
    %v455 = vld [vmem:[%s3] sm:$0x1]
    %v457 = vlaneseq
    %v458 = vshrl.u32 %v457, 7
    %v459 = vsub.s32 0, %v458
    %v460 = vrot.slane %v455, %v459
    %v462 = vadd.f32 %v450, %v460
    %v463 = vxor.u32 %v462, 2147483648
    %v464 = vmul.f32 %v463, 1.442695
    %v465 = vpow.pop %v464
    %v466 = vadd.f32 %v465, 1.0
    %v467 = vrcp.pop %v466
    %v468 = vmul.f32 1.0, %v467
    %v469 = vmul.f32 %v462, %v468
    %v470 = vpack.c.bf16 %v469, %v469
    %v471 = vld [vmem:[%s4] sm:$0xf]
    %v472 = vld [vmem:[%s4 + $0x4] sm:$0xf]
    %v473 = vld [vmem:[%s4 + $0x8] sm:$0xf]
    %v474 = vld [vmem:[%s4 + $0xc] sm:$0xf]
    %v475 = vld [vmem:[%s5] sm:$0x1]
    %v477 = vlaneseq
    %v478 = vshrl.u32 %v477, 7
    %v479 = vsub.s32 0, %v478
    %v480 = vrot.slane %v475, %v479
    %v486 = vunpack.c.l.b16 %v471
    %v487 = vunpack.c.l.b16 %v472
    %v488 = vunpack.c.l.b16 %v473
    %v489 = vunpack.c.l.b16 %v474
    %v490 = vpack.c.b16 %v487, %v486
    %v491 = vpack.c.b16 %v489, %v488
    %vm494 = vcmask 261120
    %v496 = vsel %vm494, %v470, 0
    %498 = vmatprep.subr.bf16.mxu0 0
    %499 = vmatpush1.bf16.msra.mxu0 %v490
    %500 = vmatprep.subr.bf16.mxu0 0
    %501 = vmatpush1.bf16.msra.mxu0 %v491
    %502 = vmatprep.subr.bf16.mxu0 0
    %503 = vmatpush1.bf16.msra.mxu0 0
    %504 = vmatprep.subr.bf16.mxu0 0
    %505 = vmatpush1.bf16.msra.mxu0 0
    %506 = vmatprep.subr.bf16.mxu0 0
    %507 = vmatpush1.bf16.msra.mxu0 0
    %508 = vmatprep.subr.bf16.mxu0 0
    %509 = vmatpush1.bf16.msra.mxu0 0
    %510 = vmatprep.subr.bf16.mxu0 0
    %511 = vmatpush1.bf16.msra.mxu0 0
    %512 = vmatprep.subr.bf16.mxu0 0
    %513 = vmatpush1.bf16.msra.mxu0 0
    %514 = vmatprep.subr.bf16.mxu0 0
    %515 = vmatpush1.bf16.msra.mxu0 0
    %516 = vmatprep.subr.bf16.mxu0 0
    %517 = vmatpush1.bf16.msra.mxu0 0
    %518 = vmatprep.subr.bf16.mxu0 0
    %519 = vmatpush1.bf16.msra.mxu0 0
    %520 = vmatprep.subr.bf16.mxu0 0
    %521 = vmatpush1.bf16.msra.mxu0 0
    %522 = vmatprep.subr.bf16.mxu0 0
    %523 = vmatpush1.bf16.msra.mxu0 0
    %524 = vmatprep.subr.bf16.mxu0 0
    %525 = vmatpush1.bf16.msra.mxu0 0
    %526 = vmatprep.subr.bf16.mxu0 0
    %527 = vmatpush1.bf16.msra.mxu0 0
    %528 = vmatprep.subr.bf16.mxu0 0
    %529 = vmatpush1.bf16.msra.mxu0 0
    %530 = vmatprep.mubr.bf16.mxu0 0
    %531 = vmatmul.mubr.bf16.gmra.mrb[0].mxu0 %v496
    %v532 = vpop.f32.mrb[0].mxu0
    %v533 = vadd.f32 %v480, %v532
    %v534 = vpop.f32.mrb[0].mxu0
    %v535 = vpop.f32.mrb[0].mxu0
    %v536 = vpop.f32.mrb[0].mxu0
    %537 = vdwg.mxu0
    %538 = vst [vmem:[#allocation2] sm:$0xff] %v533
    // Predicated region
    $region26: #{tpu_custom_call.1} parent=1 // pred_check
      _
    $region27: #{tpu_custom_call.1} parent=1 // pred_check_branch
      %540 = sbr.rel (0) target = $region29
    $region28: #{tpu_custom_call.1} parent=1 // pred_region
      %s542 = ssub.s32 128, 128
      %543 = vsyncadd [#allocation3], %s542
      %s545 = sshll.u32 [#allocation2], 4
      %s546 = int_to_ptr.vmem [resolvable:$true] %s545
      %548 = dma.vmem_to_hbm [thread:$0]  %s546, 128, %s6, [#allocation3]
    $region29: #{tpu_custom_call.1} parent=1 // pred_fallthru
      _
    // Predicated region
    $region30: #{tpu_custom_call.1} parent=1 // pred_check
      _
    $region31: #{tpu_custom_call.1} parent=1 // pred_check_branch
      %550 = sbr.rel (0) target = $region33
    $region32: #{tpu_custom_call.1} parent=1 // pred_region
      %551 = dma.done [#allocation3], 128
    $region33: #{tpu_custom_call.1} parent=1 // pred_fallthru
      _
    %552 = vsyncpa [#allocation3], 1

</llo_original>
